<compile_context>
chip_gen: v6e
topology: v6e:2x2x1
jax: 0.10.0
libtpu: 0.0.40
codegen_flags: <defaults>
</compile_context>

<pallas_src>
import jax
import jax.numpy as jnp
from jax.experimental import pallas as pl
from jax.experimental.pallas import tpu as pltpu


def _round_up(x, m):
    return ((x + m - 1) // m) * m


def mlp_kernel(x_ref, w1_ref, b1_ref, w2_ref, b2_ref, w3_ref, b3_ref, o_ref):
    # fc1 + ReLU (dropout identity at inference). bf16 MXU operands, fp32 accumulate.
    x = x_ref[...].astype(jnp.bfloat16)
    h1 = jnp.dot(x, w1_ref[...], preferred_element_type=jnp.float32)
    h1 = jnp.maximum(h1 + b1_ref[...], 0.0)            # fp32 elementwise (v5e-safe)

    # fc2 + ReLU
    h2 = jnp.dot(h1.astype(jnp.bfloat16), w2_ref[...],
                 preferred_element_type=jnp.float32)
    h2 = jnp.maximum(h2 + b2_ref[...], 0.0)

    # classifier: N=1 output -> VPU multiply + cross-lane reduce (no MXU push/pop)
    out = jnp.sum(h2 * w3_ref[...], axis=-1, keepdims=True) + b3_ref[...]
    o_ref[...] = out.astype(o_ref.dtype)


def mlp_forward(x, w1, b1, w2, b2, w3, b3, *, tm=256):
    """x: (B, n_feats) f32. w1:(n_feats,h1) w2:(h1,h2) w3:(1,h2); biases (1, dim)."""
    B, n_feats = x.shape

    # Cast matmul weights to bf16 once in the wrapper (they are VMEM-resident,
    # so the cast is not repeated per grid step).
    w1 = w1.astype(jnp.bfloat16)
    w2 = w2.astype(jnp.bfloat16)

    # Batch tile: multiple of 8 sublanes; shrink for tiny batches, pad up otherwise.
    # TM=256 keeps total VMEM use well under v7x's 64 MiB even with double buffering.
    tm = min(tm, _round_up(B, 8))
    B_pad = _round_up(B, tm)
    if B_pad != B:
        x = jnp.pad(x, ((0, B_pad - B), (0, 0)))
    grid = (B_pad // tm,)

    resident = lambda shape: pl.BlockSpec(shape, lambda i: (0, 0))

    out = pl.pallas_call(
        mlp_kernel,
        out_shape=jax.ShapeDtypeStruct((B_pad, 1), jnp.float32),
        grid=grid,
        in_specs=[
            pl.BlockSpec((tm, n_feats), lambda i: (i, 0)),   # activations, pipelined
            resident(w1.shape), resident(b1.shape),          # weights/biases pinned
            resident(w2.shape), resident(b2.shape),
            resident(w3.shape), resident(b3.shape),
        ],
        out_specs=pl.BlockSpec((tm, 1), lambda i: (i, 0)),
        compiler_params=pltpu.CompilerParams(
            dimension_semantics=("parallel",)),              # megacore on v7x
    )(x, w1, b1, w2, b2, w3, b3)
    return out[:B]


def init_params(key, n_feats, hidden1=128, hidden2=256):
    # Deterministic init matching nn.Linear's uniform(-1/sqrt(fan_in), 1/sqrt(fan_in)).
    ks = jax.random.split(key, 6)

    def lin(kw, kb, fan_in, fan_out, w_shape):
        bound = 1.0 / (fan_in ** 0.5)
        w = jax.random.uniform(kw, w_shape, jnp.float32, -bound, bound)
        b = jax.random.uniform(kb, (1, fan_out), jnp.float32, -bound, bound)
        return w, b

    w1, b1 = lin(ks[0], ks[1], n_feats, hidden1, (n_feats, hidden1))
    w2, b2 = lin(ks[2], ks[3], hidden1, hidden2, (hidden1, hidden2))
    # classifier weight kept as (1, hidden2) for the lane-reduce formulation
    w3, b3 = lin(ks[4], ks[5], hidden2, 1, (1, hidden2))
    return w1, b1, w2, b2, w3, b3


if __name__ == "__main__":
    key = jax.random.PRNGKey(0)
    B = 512        # batch (2 grid steps at tm=256, exercises pipelining + parallel axis)
    n_feats = 32   # stand-in for len(temp_bloods.columns)

    kx, kp = jax.random.split(key)
    x = jax.random.normal(kx, (B, n_feats), dtype=jnp.float32)
    params = init_params(kp, n_feats)

    out = mlp_forward(x, *params)
    jax.block_until_ready(out)

    # Pure-JAX reference with the same bf16-operand / fp32-accumulate arithmetic.
    w1, b1, w2, b2, w3, b3 = params
    h1 = jnp.maximum(
        jnp.dot(x.astype(jnp.bfloat16), w1.astype(jnp.bfloat16),
                preferred_element_type=jnp.float32) + b1, 0.0)
    h2 = jnp.maximum(
        jnp.dot(h1.astype(jnp.bfloat16), w2.astype(jnp.bfloat16),
                preferred_element_type=jnp.float32) + b2, 0.0)
    ref = jnp.sum(h2 * w3, axis=-1, keepdims=True) + b3

    assert out.shape == (B, 1)
    assert jnp.allclose(out, ref, atol=1e-2, rtol=1e-2), float(jnp.max(jnp.abs(out - ref)))

    print("KERNEL_OK")
</pallas_src>

<mosaic_0001>
module attributes {stable_mosaic.version = 11 : i64} {
  func.func @mlp_kernel(%arg0: i32, %arg1: memref<256x32xf32, #tpu.memory_space<vmem>>, %arg2: memref<32x128xbf16, #tpu.memory_space<vmem>>, %arg3: memref<1x128xf32, #tpu.memory_space<vmem>>, %arg4: memref<128x256xbf16, #tpu.memory_space<vmem>>, %arg5: memref<1x256xf32, #tpu.memory_space<vmem>>, %arg6: memref<1x256xf32, #tpu.memory_space<vmem>>, %arg7: memref<1x1xf32, #tpu.memory_space<vmem>>, %arg8: memref<256x1xf32, #tpu.memory_space<vmem>>) attributes {dimension_semantics = [#tpu.dimension_semantics<parallel>], iteration_bounds = array<i64: 2>, scalar_prefetch = 0 : i64, scratch_operands = 0 : i64, tpu.core_type = #tpu.core_type<tc>, window_params = [{transform_indices = @transform_0, window_bounds = array<i64: 256, 32>}, {pipeline_mode = #tpu.pipeline_mode<synchronous>, transform_indices = @transform_1, window_bounds = array<i64: 32, 128>}, {pipeline_mode = #tpu.pipeline_mode<synchronous>, transform_indices = @transform_2, window_bounds = array<i64: 1, 128>}, {pipeline_mode = #tpu.pipeline_mode<synchronous>, transform_indices = @transform_3, window_bounds = array<i64: 128, 256>}, {pipeline_mode = #tpu.pipeline_mode<synchronous>, transform_indices = @transform_4, window_bounds = array<i64: 1, 256>}, {pipeline_mode = #tpu.pipeline_mode<synchronous>, transform_indices = @transform_5, window_bounds = array<i64: 1, 256>}, {pipeline_mode = #tpu.pipeline_mode<synchronous>, transform_indices = @transform_6, window_bounds = array<i64: 1, 1>}, {transform_indices = @transform_7, window_bounds = array<i64: 256, 1>}]} {
    %c0 = arith.constant 0 : index
    %c0_0 = arith.constant 0 : index
    %0 = vector.load %arg1[%c0, %c0_0] : memref<256x32xf32, #tpu.memory_space<vmem>>, vector<256x32xf32>
    %1 = arith.truncf %0 : vector<256x32xf32> to vector<256x32xbf16>
    %c0_1 = arith.constant 0 : index
    %c0_2 = arith.constant 0 : index
    %2 = vector.load %arg2[%c0_1, %c0_2] : memref<32x128xbf16, #tpu.memory_space<vmem>>, vector<32x128xbf16>
    %cst = arith.constant dense<0.000000e+00> : vector<256x128xf32>
    %3 = tpu.matmul %1, %2, %cst {dimension_numbers = #tpu.dot_dimension_numbers<[1], [0], [0], [1], [0, 0, 1, 1], [], []>} : vector<256x32xbf16>, vector<32x128xbf16>, vector<256x128xf32> -> vector<256x128xf32>
    %c0_3 = arith.constant 0 : index
    %c0_4 = arith.constant 0 : index
    %4 = vector.load %arg3[%c0_3, %c0_4] : memref<1x128xf32, #tpu.memory_space<vmem>>, vector<1x128xf32>
    %5 = vector.broadcast %4 : vector<1x128xf32> to vector<256x128xf32>
    %6 = arith.addf %3, %5 : vector<256x128xf32>
    %cst_5 = arith.constant 0.000000e+00 : f32
    %7 = vector.broadcast %cst_5 : f32 to vector<256x128xf32>
    %8 = arith.maximumf %6, %7 : vector<256x128xf32>
    %9 = arith.truncf %8 : vector<256x128xf32> to vector<256x128xbf16>
    %c0_6 = arith.constant 0 : index
    %c0_7 = arith.constant 0 : index
    %10 = vector.load %arg4[%c0_6, %c0_7] : memref<128x256xbf16, #tpu.memory_space<vmem>>, vector<128x256xbf16>
    %cst_8 = arith.constant dense<0.000000e+00> : vector<256x256xf32>
    %11 = tpu.matmul %9, %10, %cst_8 {dimension_numbers = #tpu.dot_dimension_numbers<[1], [0], [0], [1], [0, 0, 1, 1], [], []>} : vector<256x128xbf16>, vector<128x256xbf16>, vector<256x256xf32> -> vector<256x256xf32>
    %c0_9 = arith.constant 0 : index
    %c0_10 = arith.constant 0 : index
    %12 = vector.load %arg5[%c0_9, %c0_10] : memref<1x256xf32, #tpu.memory_space<vmem>>, vector<1x256xf32>
    %13 = vector.broadcast %12 : vector<1x256xf32> to vector<256x256xf32>
    %14 = arith.addf %11, %13 : vector<256x256xf32>
    %cst_11 = arith.constant 0.000000e+00 : f32
    %15 = vector.broadcast %cst_11 : f32 to vector<256x256xf32>
    %16 = arith.maximumf %14, %15 : vector<256x256xf32>
    %c0_12 = arith.constant 0 : index
    %c0_13 = arith.constant 0 : index
    %17 = vector.load %arg6[%c0_12, %c0_13] : memref<1x256xf32, #tpu.memory_space<vmem>>, vector<1x256xf32>
    %18 = vector.broadcast %17 : vector<1x256xf32> to vector<256x256xf32>
    %19 = arith.mulf %16, %18 : vector<256x256xf32>
    %cst_14 = arith.constant dense<0.000000e+00> : vector<256xf32>
    %20 = vector.multi_reduction <add>, %19, %cst_14 [1] : vector<256x256xf32> to vector<256xf32>
    %21 = vector.shape_cast %20 : vector<256xf32> to vector<256x1xf32>
    %c0_15 = arith.constant 0 : index
    %c0_16 = arith.constant 0 : index
    %22 = vector.load %arg7[%c0_15, %c0_16] : memref<1x1xf32, #tpu.memory_space<vmem>>, vector<1x1xf32>
    %23 = vector.broadcast %22 : vector<1x1xf32> to vector<256x1xf32>
    %24 = arith.addf %21, %23 : vector<256x1xf32>
    %c0_17 = arith.constant 0 : index
    %c0_18 = arith.constant 0 : index
    %25 = vector.load %arg8[%c0_17, %c0_18] : memref<256x1xf32, #tpu.memory_space<vmem>>, vector<256x1xf32>
    tpu.vector_store %arg8[%c0_17, %c0_18], %24 {strides = array<i32>} : memref<256x1xf32, #tpu.memory_space<vmem>>, vector<256x1xf32>,
    return
  }
  func.func @transform_0(%arg0: i32) -> (i32, i32) {
    %c0_i32 = arith.constant 0 : i32
    %c0_i32_0 = arith.constant 0 : i32
    return %arg0, %c0_i32 : i32, i32
  }
  func.func @transform_1(%arg0: i32) -> (i32, i32) {
    %c0_i32 = arith.constant 0 : i32
    %c0_i32_0 = arith.constant 0 : i32
    %c0_i32_1 = arith.constant 0 : i32
    return %c0_i32, %c0_i32_0 : i32, i32
  }
  func.func @transform_2(%arg0: i32) -> (i32, i32) {
    %c0_i32 = arith.constant 0 : i32
    %c0_i32_0 = arith.constant 0 : i32
    %c0_i32_1 = arith.constant 0 : i32
    return %c0_i32, %c0_i32_0 : i32, i32
  }
  func.func @transform_3(%arg0: i32) -> (i32, i32) {
    %c0_i32 = arith.constant 0 : i32
    %c0_i32_0 = arith.constant 0 : i32
    %c0_i32_1 = arith.constant 0 : i32
    return %c0_i32, %c0_i32_0 : i32, i32
  }
  func.func @transform_4(%arg0: i32) -> (i32, i32) {
    %c0_i32 = arith.constant 0 : i32
    %c0_i32_0 = arith.constant 0 : i32
    %c0_i32_1 = arith.constant 0 : i32
    return %c0_i32, %c0_i32_0 : i32, i32
  }
  func.func @transform_5(%arg0: i32) -> (i32, i32) {
    %c0_i32 = arith.constant 0 : i32
    %c0_i32_0 = arith.constant 0 : i32
    %c0_i32_1 = arith.constant 0 : i32
    return %c0_i32, %c0_i32_0 : i32, i32
  }
  func.func @transform_6(%arg0: i32) -> (i32, i32) {
    %c0_i32 = arith.constant 0 : i32
    %c0_i32_0 = arith.constant 0 : i32
    %c0_i32_1 = arith.constant 0 : i32
    return %c0_i32, %c0_i32_0 : i32, i32
  }
  func.func @transform_7(%arg0: i32) -> (i32, i32) {
    %c0_i32 = arith.constant 0 : i32
    %c0_i32_0 = arith.constant 0 : i32
    return %arg0, %c0_i32 : i32, i32
  }
}

</mosaic_0001>

<llo_original>
// kernel: tpu_custom_call.1
$region0: #{tpu_custom_call.1}
  #allocation0 [shape = 'u32[]', space=smem, size = 0x4, offset = 0x4, fixed_abs, tag = 'smem constant byte address 0x4 - core index']
  #allocation1 [shape = 'u32[144,128]{1,0:T(1,128)}', space=vmem, size = 0x12000, scoped, tag = 'internal scratch']
  #allocation2 [shape = 'f32[1,1]{1,0:T(1,128)S(1)}', space=vmem, size = 0x200, scoped, tag = 'scoped memory for tpu_custom_call.1']
  %s0 = inlined_call_operand.vmem [shape: f32[512,32], index: 0, kind: input, shape index: {}]
  %s1 = inlined_call_operand.vmem [shape: bf16[32,128], index: 1, kind: input, shape index: {}]
  %s2 = inlined_call_operand.vmem [shape: f32[1,128], index: 2, kind: input, shape index: {}]
  %s3 = inlined_call_operand.vmem [shape: bf16[128,256], index: 3, kind: input, shape index: {}]
  %s4 = inlined_call_operand.vmem [shape: f32[1,256], index: 4, kind: input, shape index: {}]
  %s5 = inlined_call_operand.vmem [shape: f32[1,256], index: 5, kind: input, shape index: {}]
  %s6 = inlined_call_operand.<no memory space> [shape: f32[1,1], index: 6, kind: input, shape index: {}]
  %s7 = inlined_call_operand.vmem [shape: f32[512,1], index: 7, kind: output, shape index: {}]
  %s8 = sld [smem:[#allocation0]]
  $region61: #{tpu_custom_call.1} parent=0
    _
  %s10 = ssub.s32 1, %s8
  %s11 = scalar_select 0, %s10, %s8
  %v12 = vstv %s6
  %13 = vst [vmem:[#allocation2] sm:$0x1] %v12
  loop: start=0, step=1, limit=4
  $region2: #{tpu_custom_call.1} parent=0 // loop_pre_header
    _
  $region3: #{tpu_custom_call.1} parent=0 // loop_header
    %s15 = sphi 0, %s19
    %p16 = scmp.ge.s32.totalorder %s15, 4
    %s25 = sphi 0, %s27
    %s28 = sphi 0, %s25
    %s29 = sphi 0, %s28
    %s45 = sphi 0, %s29
    %s49 = sphi 0, %s49
    %s51 = sphi 0, %s49
    %s52 = sphi 0, %s51
    %s66 = sphi 0, %s52
    %s70 = sphi 0, %s70
    %s72 = sphi 0, %s70
    %s73 = sphi 0, %s72
    %s87 = sphi 0, %s73
    %s91 = sphi 0, %s91
    %s93 = sphi 0, %s91
    %s94 = sphi 0, %s93
    %s108 = sphi 0, %s94
    %s112 = sphi 0, %s112
    %s114 = sphi 0, %s112
    %s115 = sphi 0, %s114
    %s129 = sphi 0, %s115
    %s133 = sphi 0, %s133
    %s135 = sphi 0, %s133
    %s136 = sphi 0, %s135
    %s150 = sphi 0, %s136
    %s154 = sphi 0, %s154
    %s156 = sphi 0, %s154
    %s157 = sphi 0, %s156
    %s171 = sphi 0, %s157
    %s177 = sphi 0, %s179
    %s180 = sphi 0, %s177
    %s181 = sphi 0, %s180
    %s197 = sphi 0, %s181
  $region4: #{tpu_custom_call.1} parent=0 // loop_header_branch
    %18 = sbr.rel (%p16) target = $region8
  $region5: #{tpu_custom_call.1} parent=0 // loop_body
    %s20 = ssub.s32 %s15, 1
    %s21 = ssub.s32 %s15, 2
    %s22 = sadd.s32 %s15, 1
    %s23 = ssub.s32 %s15, %s22
    %p24 = scmp.eq.s32.totalorder %s23, 0
    %s26 = sadd.s32 %s25, 1
    %s27 = scalar_select %p24, %s25, %s26
    %p30 = pneg %p24
    %p31 = scmp.eq.s32.totalorder %s15, 1
    %p32 = por %p30, %p31
    %p33 = scmp.ne.s32.totalorder %s25, %s28
    %p34 = scmp.eq.s32.totalorder %s15, 0
    %p35 = por %p33, %p34
    %p36 = scmp.ne.s32.totalorder %s25, %s28
    %p37 = scmp.eq.s32.totalorder %s20, 1
    %p38 = por %p36, %p37
    %p39 = scmp.ne.s32.totalorder %s28, %s29
    %p40 = scmp.eq.s32.totalorder %s20, 0
    %p41 = por %p39, %p40
    %p42 = scmp.ne.s32.totalorder %s28, %s29
    %p43 = scmp.eq.s32.totalorder %s21, 1
    %p44 = por %p42, %p43
    %p46 = scmp.ne.s32.totalorder %s29, %s45
    %p47 = scmp.eq.s32.totalorder %s21, 0
    %p48 = por %p46, %p47
    %s50 = sadd.s32 %s49, 1
    %p53 = scmp.eq.s32.totalorder %s15, 1
    %p54 = scmp.ne.s32.totalorder %s49, %s51
    %p55 = scmp.eq.s32.totalorder %s15, 0
    %p56 = por %p54, %p55
    %p57 = scmp.ne.s32.totalorder %s49, %s51
    %p58 = scmp.eq.s32.totalorder %s20, 1
    %p59 = por %p57, %p58
    %p60 = scmp.ne.s32.totalorder %s51, %s52
    %p61 = scmp.eq.s32.totalorder %s20, 0
    %p62 = por %p60, %p61
    %p63 = scmp.ne.s32.totalorder %s51, %s52
    %p64 = scmp.eq.s32.totalorder %s21, 1
    %p65 = por %p63, %p64
    %p67 = scmp.ne.s32.totalorder %s52, %s66
    %p68 = scmp.eq.s32.totalorder %s21, 0
    %p69 = por %p67, %p68
    %s71 = sadd.s32 %s70, 1
    %p74 = scmp.eq.s32.totalorder %s15, 1
    %p75 = scmp.ne.s32.totalorder %s70, %s72
    %p76 = scmp.eq.s32.totalorder %s15, 0
    %p77 = por %p75, %p76
    %p78 = scmp.ne.s32.totalorder %s70, %s72
    %p79 = scmp.eq.s32.totalorder %s20, 1
    %p80 = por %p78, %p79
    %p81 = scmp.ne.s32.totalorder %s72, %s73
    %p82 = scmp.eq.s32.totalorder %s20, 0
    %p83 = por %p81, %p82
    %p84 = scmp.ne.s32.totalorder %s72, %s73
    %p85 = scmp.eq.s32.totalorder %s21, 1
    %p86 = por %p84, %p85
    %p88 = scmp.ne.s32.totalorder %s73, %s87
    %p89 = scmp.eq.s32.totalorder %s21, 0
    %p90 = por %p88, %p89
    %s92 = sadd.s32 %s91, 1
    %p95 = scmp.eq.s32.totalorder %s15, 1
    %p96 = scmp.ne.s32.totalorder %s91, %s93
    %p97 = scmp.eq.s32.totalorder %s15, 0
    %p98 = por %p96, %p97
    %p99 = scmp.ne.s32.totalorder %s91, %s93
    %p100 = scmp.eq.s32.totalorder %s20, 1
    %p101 = por %p99, %p100
    %p102 = scmp.ne.s32.totalorder %s93, %s94
    %p103 = scmp.eq.s32.totalorder %s20, 0
    %p104 = por %p102, %p103
    %p105 = scmp.ne.s32.totalorder %s93, %s94
    %p106 = scmp.eq.s32.totalorder %s21, 1
    %p107 = por %p105, %p106
    %p109 = scmp.ne.s32.totalorder %s94, %s108
    %p110 = scmp.eq.s32.totalorder %s21, 0
    %p111 = por %p109, %p110
    %s113 = sadd.s32 %s112, 1
    %p116 = scmp.eq.s32.totalorder %s15, 1
    %p117 = scmp.ne.s32.totalorder %s112, %s114
    %p118 = scmp.eq.s32.totalorder %s15, 0
    %p119 = por %p117, %p118
    %p120 = scmp.ne.s32.totalorder %s112, %s114
    %p121 = scmp.eq.s32.totalorder %s20, 1
    %p122 = por %p120, %p121
    %p123 = scmp.ne.s32.totalorder %s114, %s115
    %p124 = scmp.eq.s32.totalorder %s20, 0
    %p125 = por %p123, %p124
    %p126 = scmp.ne.s32.totalorder %s114, %s115
    %p127 = scmp.eq.s32.totalorder %s21, 1
    %p128 = por %p126, %p127
    %p130 = scmp.ne.s32.totalorder %s115, %s129
    %p131 = scmp.eq.s32.totalorder %s21, 0
    %p132 = por %p130, %p131
    %s134 = sadd.s32 %s133, 1
    %p137 = scmp.eq.s32.totalorder %s15, 1
    %p138 = scmp.ne.s32.totalorder %s133, %s135
    %p139 = scmp.eq.s32.totalorder %s15, 0
    %p140 = por %p138, %p139
    %p141 = scmp.ne.s32.totalorder %s133, %s135
    %p142 = scmp.eq.s32.totalorder %s20, 1
    %p143 = por %p141, %p142
    %p144 = scmp.ne.s32.totalorder %s135, %s136
    %p145 = scmp.eq.s32.totalorder %s20, 0
    %p146 = por %p144, %p145
    %p147 = scmp.ne.s32.totalorder %s135, %s136
    %p148 = scmp.eq.s32.totalorder %s21, 1
    %p149 = por %p147, %p148
    %p151 = scmp.ne.s32.totalorder %s136, %s150
    %p152 = scmp.eq.s32.totalorder %s21, 0
    %p153 = por %p151, %p152
    %s155 = sadd.s32 %s154, 1
    %p158 = scmp.eq.s32.totalorder %s15, 1
    %p159 = scmp.ne.s32.totalorder %s154, %s156
    %p160 = scmp.eq.s32.totalorder %s15, 0
    %p161 = por %p159, %p160
    %p162 = scmp.ne.s32.totalorder %s154, %s156
    %p163 = scmp.eq.s32.totalorder %s20, 1
    %p164 = por %p162, %p163
    %p165 = scmp.ne.s32.totalorder %s156, %s157
    %p166 = scmp.eq.s32.totalorder %s20, 0
    %p167 = por %p165, %p166
    %p168 = scmp.ne.s32.totalorder %s156, %s157
    %p169 = scmp.eq.s32.totalorder %s21, 1
    %p170 = por %p168, %p169
    %p172 = scmp.ne.s32.totalorder %s157, %s171
    %p173 = scmp.eq.s32.totalorder %s21, 0
    %p174 = por %p172, %p173
    %s175 = ssub.s32 %s15, %s22
    %p176 = scmp.eq.s32.totalorder %s175, 0
    %s178 = sadd.s32 %s177, 1
    %s179 = scalar_select %p176, %s177, %s178
    %p182 = pneg %p176
    %p183 = scmp.eq.s32.totalorder %s15, 1
    %p184 = por %p182, %p183
    %p185 = scmp.ne.s32.totalorder %s177, %s180
    %p186 = scmp.eq.s32.totalorder %s15, 0
    %p187 = por %p185, %p186
    %p188 = scmp.ne.s32.totalorder %s177, %s180
    %p189 = scmp.eq.s32.totalorder %s20, 1
    %p190 = por %p188, %p189
    %p191 = scmp.ne.s32.totalorder %s180, %s181
    %p192 = scmp.eq.s32.totalorder %s20, 0
    %p193 = por %p191, %p192
    %p194 = scmp.ne.s32.totalorder %s180, %s181
    %p195 = scmp.eq.s32.totalorder %s21, 1
    %p196 = por %p194, %p195
    %p198 = scmp.ne.s32.totalorder %s181, %s197
    %p199 = scmp.eq.s32.totalorder %s21, 0
    %p200 = por %p198, %p199
    %p201 = scmp.le.s32.totalorder 1, %s15
    %p202 = scmp.lt.s32.totalorder %s15, 3
    %p203 = pnand %p201, %p202
    %p204 = pneg %p203
    // Predicated region
    $region9: #{tpu_custom_call.1} parent=5 // pred_check
      _
    $region10: #{tpu_custom_call.1} parent=5 // pred_check_branch
      %206 = sbr.rel (%p203) target = $region12
    $region11: #{tpu_custom_call.1} parent=5 // pred_region
      %s207 = ssub.s32 %s15, 1
      // Predicated region
      $region13: #{tpu_custom_call.1} parent=11 // pred_check
        %p208 = pneg %p62
      $region14: #{tpu_custom_call.1} parent=11 // pred_check_branch
        %210 = sbr.rel (%p208) target = $region16
      $region15: #{tpu_custom_call.1} parent=11 // pred_region
        _
      $region16: #{tpu_custom_call.1} parent=11 // pred_fallthru
        _
      // Predicated region
      $region17: #{tpu_custom_call.1} parent=11 // pred_check
        %p211 = pneg %p83
      $region18: #{tpu_custom_call.1} parent=11 // pred_check_branch
        %213 = sbr.rel (%p211) target = $region20
      $region19: #{tpu_custom_call.1} parent=11 // pred_region
        _
      $region20: #{tpu_custom_call.1} parent=11 // pred_fallthru
        _
      // Predicated region
      $region21: #{tpu_custom_call.1} parent=11 // pred_check
        %p214 = pneg %p104
      $region22: #{tpu_custom_call.1} parent=11 // pred_check_branch
        %216 = sbr.rel (%p214) target = $region24
      $region23: #{tpu_custom_call.1} parent=11 // pred_region
        _
      $region24: #{tpu_custom_call.1} parent=11 // pred_fallthru
        _
      // Predicated region
      $region25: #{tpu_custom_call.1} parent=11 // pred_check
        %p217 = pneg %p125
      $region26: #{tpu_custom_call.1} parent=11 // pred_check_branch
        %219 = sbr.rel (%p217) target = $region28
      $region27: #{tpu_custom_call.1} parent=11 // pred_region
        _
      $region28: #{tpu_custom_call.1} parent=11 // pred_fallthru
        _
      // Predicated region
      $region29: #{tpu_custom_call.1} parent=11 // pred_check
        %p220 = pneg %p146
      $region30: #{tpu_custom_call.1} parent=11 // pred_check_branch
        %222 = sbr.rel (%p220) target = $region32
      $region31: #{tpu_custom_call.1} parent=11 // pred_region
        _
      $region32: #{tpu_custom_call.1} parent=11 // pred_fallthru
        _
      // Predicated region
      $region33: #{tpu_custom_call.1} parent=11 // pred_check
        %p223 = pneg %p167
      $region34: #{tpu_custom_call.1} parent=11 // pred_check_branch
        %225 = sbr.rel (%p223) target = $region36
      $region35: #{tpu_custom_call.1} parent=11 // pred_region
        _
      $region36: #{tpu_custom_call.1} parent=11 // pred_fallthru
        _
    $region12: #{tpu_custom_call.1} parent=5 // pred_fallthru
      _
    %p226 = scmp.lt.s32.totalorder %s15, 2
    // Predicated region
    $region37: #{tpu_custom_call.1} parent=5 // pred_check
      %p227 = pneg %p226
    $region38: #{tpu_custom_call.1} parent=5 // pred_check_branch
      %229 = sbr.rel (%p227) target = $region40
    $region39: #{tpu_custom_call.1} parent=5 // pred_region
      // Predicated region
      $region41: #{tpu_custom_call.1} parent=39 // pred_check
        %p230 = pneg %p35
      $region42: #{tpu_custom_call.1} parent=39 // pred_check_branch
        %232 = sbr.rel (%p230) target = $region44
      $region43: #{tpu_custom_call.1} parent=39 // pred_region
        %s233 = smul.u32 32, %s15
        %p234 = scmp.lt.s32.totalorder %s233, 63
        %s235 = scalar_select %p234, %s233, 63
        %s236 = smul.addr %s235, 8
        %s237 = scalar_lea.vmem %s0, %s236
        %s238 = smul.u32 32, %s15
      $region44: #{tpu_custom_call.1} parent=39 // pred_fallthru
        _
    $region40: #{tpu_custom_call.1} parent=5 // pred_fallthru
      _
    %p239 = scmp.le.s32.totalorder 1, %s15
    %p240 = scmp.lt.s32.totalorder %s15, 3
    %p241 = pnand %p239, %p240
    %p242 = pneg %p241
    // Predicated region
    $region45: #{tpu_custom_call.1} parent=5 // pred_check
      _
    $region46: #{tpu_custom_call.1} parent=5 // pred_check_branch
      %244 = sbr.rel (%p241) target = $region48
    $region47: #{tpu_custom_call.1} parent=5 // pred_region
      %s245 = ssub.s32 %s15, 1
      %s246 = smul.u32 32, %s20
      %p247 = scmp.lt.s32.totalorder %s246, 63
      %s248 = scalar_select %p247, %s246, 63
      %s249 = smul.addr %s248, 8
      %s250 = scalar_lea.vmem %s0, %s249
      %p251 = pneg %p41
      %p252 = pneg %p38
      %p253 = pneg %p62
      %p254 = pneg %p59
      %p255 = pneg %p83
      %p256 = pneg %p80
      %p257 = pneg %p104
      %p258 = pneg %p101
      %p259 = pneg %p125
      %p260 = pneg %p122
      %p261 = pneg %p146
      %p262 = pneg %p143
      %p263 = pneg %p167
      %p264 = pneg %p164
      %p265 = pneg %p193
      %p266 = pneg %p190
      %s267 = smul.u32 32, %s20
      %p268 = scmp.lt.s32.totalorder %s267, 63
      %s269 = scalar_select %p268, %s267, 63
      %s270 = smul.addr %s269, 8
      %s271 = scalar_lea.vmem %s7, %s270
      %s272 = smul.u32 32, %s20
      %p273 = scmp.lt.s32.totalorder %s272, 63
      %s274 = scalar_select %p273, %s272, 63
      %s275 = smul.addr %s274, 8
      %s276 = scalar_lea.vmem %s0, %s275
      %s277 = smul.u32 32, %s20
      %s278 = smul.u32 32, %s20
      %p279 = scmp.lt.s32.totalorder %s278, 63
      %s280 = scalar_select %p279, %s278, 63
      %s281 = smul.addr %s280, 8
      %s282 = scalar_lea.vmem %s7, %s281
      %s283 = smul.u32 32, %s20
      %v285 = vld [vmem:[%s276] sm:$0xff]
      %v286 = vld [vmem:[%s276 + $0x8] sm:$0xff]
      %v287 = vld [vmem:[%s276 + $0x10] sm:$0xff]
      %v288 = vld [vmem:[%s276 + $0x18] sm:$0xff]
      %v289 = vld [vmem:[%s276 + $0x20] sm:$0xff]
      %v290 = vld [vmem:[%s276 + $0x28] sm:$0xff]
      %v291 = vld [vmem:[%s276 + $0x30] sm:$0xff]
      %v292 = vld [vmem:[%s276 + $0x38] sm:$0xff]
      %v293 = vld [vmem:[%s276 + $0x40] sm:$0xff]
      %v294 = vld [vmem:[%s276 + $0x48] sm:$0xff]
      %v295 = vld [vmem:[%s276 + $0x50] sm:$0xff]
      %v296 = vld [vmem:[%s276 + $0x58] sm:$0xff]
      %v297 = vld [vmem:[%s276 + $0x60] sm:$0xff]
      %v298 = vld [vmem:[%s276 + $0x68] sm:$0xff]
      %v299 = vld [vmem:[%s276 + $0x70] sm:$0xff]
      %v300 = vld [vmem:[%s276 + $0x78] sm:$0xff]
      %v301 = vld [vmem:[%s276 + $0x80] sm:$0xff]
      %v302 = vld [vmem:[%s276 + $0x88] sm:$0xff]
      %v303 = vld [vmem:[%s276 + $0x90] sm:$0xff]
      %v304 = vld [vmem:[%s276 + $0x98] sm:$0xff]
      %v305 = vld [vmem:[%s276 + $0xa0] sm:$0xff]
      %v306 = vld [vmem:[%s276 + $0xa8] sm:$0xff]
      %v307 = vld [vmem:[%s276 + $0xb0] sm:$0xff]
      %v308 = vld [vmem:[%s276 + $0xb8] sm:$0xff]
      %v309 = vld [vmem:[%s276 + $0xc0] sm:$0xff]
      %v310 = vld [vmem:[%s276 + $0xc8] sm:$0xff]
      %v311 = vld [vmem:[%s276 + $0xd0] sm:$0xff]
      %v312 = vld [vmem:[%s276 + $0xd8] sm:$0xff]
      %v313 = vld [vmem:[%s276 + $0xe0] sm:$0xff]
      %v314 = vld [vmem:[%s276 + $0xe8] sm:$0xff]
      %v315 = vld [vmem:[%s276 + $0xf0] sm:$0xff]
      %v316 = vld [vmem:[%s276 + $0xf8] sm:$0xff]
      %v317 = vpack.c.bf16 %v286, %v285
      %v318 = vpack.c.bf16 %v288, %v287
      %v319 = vpack.c.bf16 %v290, %v289
      %v320 = vpack.c.bf16 %v292, %v291
      %v321 = vpack.c.bf16 %v294, %v293
      %v322 = vpack.c.bf16 %v296, %v295
      %v323 = vpack.c.bf16 %v298, %v297
      %v324 = vpack.c.bf16 %v300, %v299
      %v325 = vpack.c.bf16 %v302, %v301
      %v326 = vpack.c.bf16 %v304, %v303
      %v327 = vpack.c.bf16 %v306, %v305
      %v328 = vpack.c.bf16 %v308, %v307
      %v329 = vpack.c.bf16 %v310, %v309
      %v330 = vpack.c.bf16 %v312, %v311
      %v331 = vpack.c.bf16 %v314, %v313
      %v332 = vpack.c.bf16 %v316, %v315
      %v333 = vld [vmem:[%s1] sm:$0xf]
      %v334 = vld [vmem:[%s1 + $0x4] sm:$0xf]
      %v335 = vld [vmem:[%s1 + $0x8] sm:$0xf]
      %v336 = vld [vmem:[%s1 + $0xc] sm:$0xf]
      %v337 = vld [vmem:[%s2] sm:$0x1]
      %v339 = vlaneseq
      %v340 = vshrl.u32 %v339, 7
      %v341 = vsub.s32 0, %v340
      %v342 = vrot.slane %v337, %v341
      %v348 = vunpack.c.l.b16 %v333
      %v349 = vunpack.c.l.b16 %v334
      %v350 = vunpack.c.l.b16 %v335
      %v351 = vunpack.c.l.b16 %v336
      %v352 = vpack.c.b16 %v349, %v348
      %v353 = vpack.c.b16 %v351, %v350
      %vm356 = vcmask 261120
      %v358 = vsel %vm356, %v317, 0
      %v361 = vsel %vm356, %v318, 0
      %v364 = vsel %vm356, %v319, 0
      %v367 = vsel %vm356, %v320, 0
      %v370 = vsel %vm356, %v321, 0
      %v373 = vsel %vm356, %v322, 0
      %v376 = vsel %vm356, %v323, 0
      %v379 = vsel %vm356, %v324, 0
      %v382 = vsel %vm356, %v325, 0
      %v385 = vsel %vm356, %v326, 0
      %v388 = vsel %vm356, %v327, 0
      %v391 = vsel %vm356, %v328, 0
      %v394 = vsel %vm356, %v329, 0
      %v397 = vsel %vm356, %v330, 0
      %v400 = vsel %vm356, %v331, 0
      %v403 = vsel %vm356, %v332, 0
      %405 = vmatprep.subr.bf16.mxu0 0
      %406 = vmatpush1.bf16.msra.mxu0 0
      %407 = vmatprep.subr.bf16.mxu0 0
      %408 = vmatpush1.bf16.msra.mxu0 0
      %409 = vmatprep.subr.bf16.mxu0 0
      %410 = vmatpush1.bf16.msra.mxu0 0
      %411 = vmatprep.subr.bf16.mxu0 0
      %412 = vmatpush1.bf16.msra.mxu0 0
      %413 = vmatprep.subr.bf16.mxu0 0
      %414 = vmatpush1.bf16.msra.mxu0 0
      %415 = vmatprep.subr.bf16.mxu0 0
      %416 = vmatpush1.bf16.msra.mxu0 0
      %417 = vmatprep.subr.bf16.mxu0 0
      %418 = vmatpush1.bf16.msra.mxu0 %v353
      %419 = vmatprep.subr.bf16.mxu0 0
      %420 = vmatpush1.bf16.msra.mxu0 %v352
      %421 = vmatprep.subr.bf16.mxu0 0
      %422 = vmatpush2.bf16.msra.mxu0 0
      %423 = vmatprep.subr.bf16.mxu0 0
      %424 = vmatpush2.bf16.msra.mxu0 0
      %425 = vmatprep.subr.bf16.mxu0 0
      %426 = vmatpush2.bf16.msra.mxu0 0
      %427 = vmatprep.subr.bf16.mxu0 0
      %428 = vmatpush2.bf16.msra.mxu0 0
      %429 = vmatprep.subr.bf16.mxu0 0
      %430 = vmatpush2.bf16.msra.mxu0 0
      %431 = vmatprep.subr.bf16.mxu0 0
      %432 = vmatpush2.bf16.msra.mxu0 0
      %433 = vmatprep.subr.bf16.mxu0 0
      %434 = vmatpush2.bf16.msra.mxu0 0
      %435 = vmatprep.subr.bf16.mxu0 0
      %436 = vmatpush2.bf16.msra.mxu0 0
      %437 = vmatprep.mubr.bf16.mxu0 0
      %438 = vmatmul.mubr.bf16.gmra.mxu0 %v358
      %v439 = vpop.f32.mrf.mxu0
      %v440 = vadd.f32 %v342, %v439
      %v441 = vpop.f32.mrf.mxu0
      %v442 = vpop.f32.mrf.mxu0
      %v443 = vadd.f32 %v342, %v442
      %v444 = vpop.f32.mrf.mxu0
      %445 = vmatprep.mubr.bf16.mxu0 0
      %446 = vmatmul.mubr.bf16.gmra.mxu0 %v361
      %v447 = vpop.f32.mrf.mxu0
      %v448 = vadd.f32 %v342, %v447
      %v449 = vpop.f32.mrf.mxu0
      %v450 = vpop.f32.mrf.mxu0
      %v451 = vadd.f32 %v342, %v450
      %v452 = vpop.f32.mrf.mxu0
      %453 = vmatprep.mubr.bf16.mxu0 0
      %454 = vmatmul.mubr.bf16.gmra.mxu0 %v364
      %v455 = vpop.f32.mrf.mxu0
      %v456 = vadd.f32 %v342, %v455
      %v457 = vpop.f32.mrf.mxu0
      %v458 = vpop.f32.mrf.mxu0
      %v459 = vadd.f32 %v342, %v458
      %v460 = vpop.f32.mrf.mxu0
      %461 = vmatprep.mubr.bf16.mxu0 0
      %462 = vmatmul.mubr.bf16.gmra.mxu0 %v367
      %v463 = vpop.f32.mrf.mxu0
      %v464 = vadd.f32 %v342, %v463
      %v465 = vpop.f32.mrf.mxu0
      %v466 = vpop.f32.mrf.mxu0
      %v467 = vadd.f32 %v342, %v466
      %v468 = vpop.f32.mrf.mxu0
      %469 = vmatprep.mubr.bf16.mxu0 0
      %470 = vmatmul.mubr.bf16.gmra.mxu0 %v370
      %v471 = vpop.f32.mrf.mxu0
      %v472 = vadd.f32 %v342, %v471
      %v473 = vpop.f32.mrf.mxu0
      %v474 = vpop.f32.mrf.mxu0
      %v475 = vadd.f32 %v342, %v474
      %v476 = vpop.f32.mrf.mxu0
      %477 = vmatprep.mubr.bf16.mxu0 0
      %478 = vmatmul.mubr.bf16.gmra.mxu0 %v373
      %v479 = vpop.f32.mrf.mxu0
      %v480 = vadd.f32 %v342, %v479
      %v481 = vpop.f32.mrf.mxu0
      %v482 = vpop.f32.mrf.mxu0
      %v483 = vadd.f32 %v342, %v482
      %v484 = vpop.f32.mrf.mxu0
      %485 = vmatprep.mubr.bf16.mxu0 0
      %486 = vmatmul.mubr.bf16.gmra.mxu0 %v376
      %v487 = vpop.f32.mrf.mxu0
      %v488 = vadd.f32 %v342, %v487
      %v489 = vpop.f32.mrf.mxu0
      %v490 = vpop.f32.mrf.mxu0
      %v491 = vadd.f32 %v342, %v490
      %v492 = vpop.f32.mrf.mxu0
      %493 = vmatprep.mubr.bf16.mxu0 0
      %494 = vmatmul.mubr.bf16.gmra.mxu0 %v379
      %v495 = vpop.f32.mrf.mxu0
      %v496 = vadd.f32 %v342, %v495
      %v497 = vpop.f32.mrf.mxu0
      %v498 = vpop.f32.mrf.mxu0
      %v499 = vadd.f32 %v342, %v498
      %v500 = vpop.f32.mrf.mxu0
      %501 = vmatprep.mubr.bf16.mxu0 0
      %502 = vmatmul.mubr.bf16.gmra.mxu0 %v382
      %v503 = vpop.f32.mrf.mxu0
      %v504 = vadd.f32 %v342, %v503
      %v505 = vpop.f32.mrf.mxu0
      %v506 = vpop.f32.mrf.mxu0
      %v507 = vadd.f32 %v342, %v506
      %v508 = vpop.f32.mrf.mxu0
      %509 = vmatprep.mubr.bf16.mxu0 0
      %510 = vmatmul.mubr.bf16.gmra.mxu0 %v385
      %v511 = vpop.f32.mrf.mxu0
      %v512 = vadd.f32 %v342, %v511
      %v513 = vpop.f32.mrf.mxu0
      %v514 = vpop.f32.mrf.mxu0
      %v515 = vadd.f32 %v342, %v514
      %v516 = vpop.f32.mrf.mxu0
      %517 = vmatprep.mubr.bf16.mxu0 0
      %518 = vmatmul.mubr.bf16.gmra.mxu0 %v388
      %v519 = vpop.f32.mrf.mxu0
      %v520 = vadd.f32 %v342, %v519
      %v521 = vpop.f32.mrf.mxu0
      %v522 = vpop.f32.mrf.mxu0
      %v523 = vadd.f32 %v342, %v522
      %v524 = vpop.f32.mrf.mxu0
      %525 = vmatprep.mubr.bf16.mxu0 0
      %526 = vmatmul.mubr.bf16.gmra.mxu0 %v391
      %v527 = vpop.f32.mrf.mxu0
      %v528 = vadd.f32 %v342, %v527
      %v529 = vpop.f32.mrf.mxu0
      %v530 = vpop.f32.mrf.mxu0
      %v531 = vadd.f32 %v342, %v530
      %v532 = vpop.f32.mrf.mxu0
      %533 = vmatprep.mubr.bf16.mxu0 0
      %534 = vmatmul.mubr.bf16.gmra.mxu0 %v394
      %v535 = vpop.f32.mrf.mxu0
      %v536 = vadd.f32 %v342, %v535
      %v537 = vpop.f32.mrf.mxu0
      %v538 = vpop.f32.mrf.mxu0
      %v539 = vadd.f32 %v342, %v538
      %v540 = vpop.f32.mrf.mxu0
      %541 = vmatprep.mubr.bf16.mxu0 0
      %542 = vmatmul.mubr.bf16.gmra.mxu0 %v397
      %v543 = vpop.f32.mrf.mxu0
      %v544 = vadd.f32 %v342, %v543
      %v545 = vpop.f32.mrf.mxu0
      %v546 = vpop.f32.mrf.mxu0
      %v547 = vadd.f32 %v342, %v546
      %v548 = vpop.f32.mrf.mxu0
      %549 = vmatprep.mubr.bf16.mxu0 0
      %550 = vmatmul.mubr.bf16.gmra.mxu0 %v400
      %v551 = vpop.f32.mrf.mxu0
      %v552 = vadd.f32 %v342, %v551
      %v553 = vpop.f32.mrf.mxu0
      %v554 = vpop.f32.mrf.mxu0
      %v555 = vadd.f32 %v342, %v554
      %v556 = vpop.f32.mrf.mxu0
      %557 = vmatprep.mubr.bf16.mxu0 0
      %558 = vmatmul.mubr.bf16.gmra.mxu0 %v403
      %v559 = vpop.f32.mrf.mxu0
      %v560 = vadd.f32 %v342, %v559
      %v561 = vpop.f32.mrf.mxu0
      %v562 = vpop.f32.mrf.mxu0
      %v563 = vadd.f32 %v342, %v562
      %v564 = vpop.f32.mrf.mxu0
      %565 = vdwg.mxu0
      %v566 = vmax.f32 %v440, 0.0
      %v567 = vmax.f32 %v443, 0.0
      %v568 = vmax.f32 %v448, 0.0
      %v569 = vmax.f32 %v451, 0.0
      %v570 = vmax.f32 %v456, 0.0
      %v571 = vmax.f32 %v459, 0.0
      %v572 = vmax.f32 %v464, 0.0
      %v573 = vmax.f32 %v467, 0.0
      %v574 = vmax.f32 %v472, 0.0
      %v575 = vmax.f32 %v475, 0.0
      %v576 = vmax.f32 %v480, 0.0
      %v577 = vmax.f32 %v483, 0.0
      %v578 = vmax.f32 %v488, 0.0
      %v579 = vmax.f32 %v491, 0.0
      %v580 = vmax.f32 %v496, 0.0
      %v581 = vmax.f32 %v499, 0.0
      %v582 = vmax.f32 %v504, 0.0
      %v583 = vmax.f32 %v507, 0.0
      %v584 = vmax.f32 %v512, 0.0
      %v585 = vmax.f32 %v515, 0.0
      %v586 = vmax.f32 %v520, 0.0
      %v587 = vmax.f32 %v523, 0.0
      %v588 = vmax.f32 %v528, 0.0
      %v589 = vmax.f32 %v531, 0.0
      %v590 = vmax.f32 %v536, 0.0
      %v591 = vmax.f32 %v539, 0.0
      %v592 = vmax.f32 %v544, 0.0
      %v593 = vmax.f32 %v547, 0.0
      %v594 = vmax.f32 %v552, 0.0
      %v595 = vmax.f32 %v555, 0.0
      %v596 = vmax.f32 %v560, 0.0
      %v597 = vmax.f32 %v563, 0.0
      %v598 = vpack.c.bf16 %v567, %v566
      %v599 = vpack.c.bf16 %v569, %v568
      %v600 = vpack.c.bf16 %v571, %v570
      %v601 = vpack.c.bf16 %v573, %v572
      %v602 = vpack.c.bf16 %v575, %v574
      %v603 = vpack.c.bf16 %v577, %v576
      %v604 = vpack.c.bf16 %v579, %v578
      %v605 = vpack.c.bf16 %v581, %v580
      %v606 = vpack.c.bf16 %v583, %v582
      %v607 = vpack.c.bf16 %v585, %v584
      %v608 = vpack.c.bf16 %v587, %v586
      %v609 = vpack.c.bf16 %v589, %v588
      %v610 = vpack.c.bf16 %v591, %v590
      %v611 = vpack.c.bf16 %v593, %v592
      %v612 = vpack.c.bf16 %v595, %v594
      %v613 = vpack.c.bf16 %v597, %v596
      %v614 = vld [vmem:[%s3] sm:$0xff]
      %v615 = vld [vmem:[%s3 + $0x8] sm:$0xff]
      %v616 = vld [vmem:[%s3 + $0x10] sm:$0xff]
      %v617 = vld [vmem:[%s3 + $0x18] sm:$0xff]
      %v618 = vld [vmem:[%s3 + $0x20] sm:$0xff]
      %v619 = vld [vmem:[%s3 + $0x28] sm:$0xff]
      %v620 = vld [vmem:[%s3 + $0x30] sm:$0xff]
      %v621 = vld [vmem:[%s3 + $0x38] sm:$0xff]
      %v622 = vld [vmem:[%s3 + $0x40] sm:$0xff]
      %v623 = vld [vmem:[%s3 + $0x48] sm:$0xff]
      %v624 = vld [vmem:[%s3 + $0x50] sm:$0xff]
      %v625 = vld [vmem:[%s3 + $0x58] sm:$0xff]
      %v626 = vld [vmem:[%s3 + $0x60] sm:$0xff]
      %v627 = vld [vmem:[%s3 + $0x68] sm:$0xff]
      %v628 = vld [vmem:[%s3 + $0x70] sm:$0xff]
      %v629 = vld [vmem:[%s3 + $0x78] sm:$0xff]
      %v630 = vld [vmem:[%s4] sm:$0x3]
      %v632 = vlaneseq
      %v633 = vshrl.u32 %v632, 7
      %v634 = vsub.s32 0, %v633
      %v635 = vrot.slane %v630, %v634
      %v636 = vlaneseq
      %v637 = vshrl.u32 %v636, 7
      %v638 = vsub.s32 1, %v637
      %v639 = vrot.slane %v630, %v638
      %v658 = vunpack.c.l.b16 %v614
      %v659 = vunpack.c.h.b16 %v614
      %v660 = vunpack.c.l.b16 %v615
      %v661 = vunpack.c.h.b16 %v615
      %v662 = vunpack.c.l.b16 %v616
      %v663 = vunpack.c.h.b16 %v616
      %v664 = vunpack.c.l.b16 %v617
      %v665 = vunpack.c.h.b16 %v617
      %v666 = vunpack.c.l.b16 %v618
      %v667 = vunpack.c.h.b16 %v618
      %v668 = vunpack.c.l.b16 %v619
      %v669 = vunpack.c.h.b16 %v619
      %v670 = vunpack.c.l.b16 %v620
      %v671 = vunpack.c.h.b16 %v620
      %v672 = vunpack.c.l.b16 %v621
      %v673 = vunpack.c.h.b16 %v621
      %v674 = vunpack.c.l.b16 %v622
      %v675 = vunpack.c.h.b16 %v622
      %v676 = vunpack.c.l.b16 %v623
      %v677 = vunpack.c.h.b16 %v623
      %v678 = vunpack.c.l.b16 %v624
      %v679 = vunpack.c.h.b16 %v624
      %v680 = vunpack.c.l.b16 %v625
      %v681 = vunpack.c.h.b16 %v625
      %v682 = vunpack.c.l.b16 %v626
      %v683 = vunpack.c.h.b16 %v626
      %v684 = vunpack.c.l.b16 %v627
      %v685 = vunpack.c.h.b16 %v627
      %v686 = vunpack.c.l.b16 %v628
      %v687 = vunpack.c.h.b16 %v628
      %v688 = vunpack.c.l.b16 %v629
      %v689 = vunpack.c.h.b16 %v629
      %v690 = vpack.c.b16 %v660, %v658
      %v691 = vpack.c.b16 %v661, %v659
      %v692 = vpack.c.b16 %v664, %v662
      %v693 = vpack.c.b16 %v665, %v663
      %v694 = vpack.c.b16 %v668, %v666
      %v695 = vpack.c.b16 %v669, %v667
      %v696 = vpack.c.b16 %v672, %v670
      %v697 = vpack.c.b16 %v673, %v671
      %v698 = vpack.c.b16 %v676, %v674
      %v699 = vpack.c.b16 %v677, %v675
      %v700 = vpack.c.b16 %v680, %v678
      %v701 = vpack.c.b16 %v681, %v679
      %v702 = vpack.c.b16 %v684, %v682
      %v703 = vpack.c.b16 %v685, %v683
      %v704 = vpack.c.b16 %v688, %v686
      %v705 = vpack.c.b16 %v689, %v687
      %722 = vmatprep.subr.bf16.mxu0 %v705
      %723 = vmatpush1.bf16.msra.mxu0 %v704
      %724 = vmatprep.subr.bf16.mxu0 %v703
      %725 = vmatpush1.bf16.msra.mxu0 %v702
      %726 = vmatprep.subr.bf16.mxu0 %v701
      %727 = vmatpush1.bf16.msra.mxu0 %v700
      %728 = vmatprep.subr.bf16.mxu0 %v699
      %729 = vmatpush1.bf16.msra.mxu0 %v698
      %730 = vmatprep.subr.bf16.mxu0 %v697
      %731 = vmatpush1.bf16.msra.mxu0 %v696
      %732 = vmatprep.subr.bf16.mxu0 %v695
      %733 = vmatpush1.bf16.msra.mxu0 %v694
      %734 = vmatprep.subr.bf16.mxu0 %v693
      %735 = vmatpush1.bf16.msra.mxu0 %v692
      %736 = vmatprep.subr.bf16.mxu0 %v691
      %737 = vmatpush1.bf16.msra.mxu0 %v690
      %738 = vmatprep.subr.bf16.mxu0 0
      %739 = vmatpush2.bf16.msra.mxu0 0
      %740 = vmatprep.subr.bf16.mxu0 0
      %741 = vmatpush2.bf16.msra.mxu0 0
      %742 = vmatprep.subr.bf16.mxu0 0
      %743 = vmatpush2.bf16.msra.mxu0 0
      %744 = vmatprep.subr.bf16.mxu0 0
      %745 = vmatpush2.bf16.msra.mxu0 0
      %746 = vmatprep.subr.bf16.mxu0 0
      %747 = vmatpush2.bf16.msra.mxu0 0
      %748 = vmatprep.subr.bf16.mxu0 0
      %749 = vmatpush2.bf16.msra.mxu0 0
      %750 = vmatprep.subr.bf16.mxu0 0
      %751 = vmatpush2.bf16.msra.mxu0 0
      %752 = vmatprep.subr.bf16.mxu0 0
      %753 = vmatpush2.bf16.msra.mxu0 0
      %754 = vmatprep.mubr.bf16.mxu0 0
      %755 = vmatmul.mubr.bf16.gmra.mxu0 %v598
      %v756 = vpop.f32.mrf.mxu0
      %v757 = vadd.f32 %v635, %v756
      %v758 = vpop.f32.mrf.mxu0
      %v759 = vadd.f32 %v639, %v758
      %v760 = vpop.f32.mrf.mxu0
      %v761 = vadd.f32 %v635, %v760
      %v762 = vpop.f32.mrf.mxu0
      %v763 = vadd.f32 %v639, %v762
      %764 = vmatprep.mubr.bf16.mxu0 0
      %765 = vmatmul.mubr.bf16.gmra.mxu0 %v599
      %v766 = vpop.f32.mrf.mxu0
      %v767 = vadd.f32 %v635, %v766
      %v768 = vpop.f32.mrf.mxu0
      %v769 = vadd.f32 %v639, %v768
      %v770 = vpop.f32.mrf.mxu0
      %v771 = vadd.f32 %v635, %v770
      %v772 = vpop.f32.mrf.mxu0
      %v773 = vadd.f32 %v639, %v772
      %774 = vmatprep.mubr.bf16.mxu0 0
      %775 = vmatmul.mubr.bf16.gmra.mxu0 %v600
      %v776 = vpop.f32.mrf.mxu0
      %v777 = vadd.f32 %v635, %v776
      %v778 = vpop.f32.mrf.mxu0
      %v779 = vadd.f32 %v639, %v778
      %v780 = vpop.f32.mrf.mxu0
      %v781 = vadd.f32 %v635, %v780
      %v782 = vpop.f32.mrf.mxu0
      %v783 = vadd.f32 %v639, %v782
      %784 = vmatprep.mubr.bf16.mxu0 0
      %785 = vmatmul.mubr.bf16.gmra.mxu0 %v601
      %v786 = vpop.f32.mrf.mxu0
      %v787 = vadd.f32 %v635, %v786
      %v788 = vpop.f32.mrf.mxu0
      %v789 = vadd.f32 %v639, %v788
      %v790 = vpop.f32.mrf.mxu0
      %v791 = vadd.f32 %v635, %v790
      %v792 = vpop.f32.mrf.mxu0
      %v793 = vadd.f32 %v639, %v792
      %794 = vmatprep.mubr.bf16.mxu0 0
      %795 = vmatmul.mubr.bf16.gmra.mxu0 %v602
      %v796 = vpop.f32.mrf.mxu0
      %v797 = vadd.f32 %v635, %v796
      %v798 = vpop.f32.mrf.mxu0
      %v799 = vadd.f32 %v639, %v798
      %v800 = vpop.f32.mrf.mxu0
      %v801 = vadd.f32 %v635, %v800
      %v802 = vpop.f32.mrf.mxu0
      %v803 = vadd.f32 %v639, %v802
      %804 = vmatprep.mubr.bf16.mxu0 0
      %805 = vmatmul.mubr.bf16.gmra.mxu0 %v603
      %v806 = vpop.f32.mrf.mxu0
      %v807 = vadd.f32 %v635, %v806
      %v808 = vpop.f32.mrf.mxu0
      %v809 = vadd.f32 %v639, %v808
      %v810 = vpop.f32.mrf.mxu0
      %v811 = vadd.f32 %v635, %v810
      %v812 = vpop.f32.mrf.mxu0
      %v813 = vadd.f32 %v639, %v812
      %814 = vmatprep.mubr.bf16.mxu0 0
      %815 = vmatmul.mubr.bf16.gmra.mxu0 %v604
      %v816 = vpop.f32.mrf.mxu0
      %v817 = vadd.f32 %v635, %v816
      %v818 = vpop.f32.mrf.mxu0
      %v819 = vadd.f32 %v639, %v818
      %v820 = vpop.f32.mrf.mxu0
      %v821 = vadd.f32 %v635, %v820
      %v822 = vpop.f32.mrf.mxu0
      %v823 = vadd.f32 %v639, %v822
      %824 = vmatprep.mubr.bf16.mxu0 0
      %825 = vmatmul.mubr.bf16.gmra.mxu0 %v605
      %v826 = vpop.f32.mrf.mxu0
      %v827 = vadd.f32 %v635, %v826
      %v828 = vpop.f32.mrf.mxu0
      %v829 = vadd.f32 %v639, %v828
      %v830 = vpop.f32.mrf.mxu0
      %v831 = vadd.f32 %v635, %v830
      %v832 = vpop.f32.mrf.mxu0
      %v833 = vadd.f32 %v639, %v832
      %834 = vmatprep.mubr.bf16.mxu0 0
      %835 = vmatmul.mubr.bf16.gmra.mxu0 %v606
      %v836 = vpop.f32.mrf.mxu0
      %v837 = vadd.f32 %v635, %v836
      %v838 = vpop.f32.mrf.mxu0
      %v839 = vadd.f32 %v639, %v838
      %v840 = vpop.f32.mrf.mxu0
      %v841 = vadd.f32 %v635, %v840
      %v842 = vpop.f32.mrf.mxu0
      %v843 = vadd.f32 %v639, %v842
      %844 = vmatprep.mubr.bf16.mxu0 0
      %845 = vmatmul.mubr.bf16.gmra.mxu0 %v607
      %v846 = vpop.f32.mrf.mxu0
      %v847 = vadd.f32 %v635, %v846
      %v848 = vpop.f32.mrf.mxu0
      %v849 = vadd.f32 %v639, %v848
      %v850 = vpop.f32.mrf.mxu0
      %v851 = vadd.f32 %v635, %v850
      %v852 = vpop.f32.mrf.mxu0
      %v853 = vadd.f32 %v639, %v852
      %854 = vmatprep.mubr.bf16.mxu0 0
      %855 = vmatmul.mubr.bf16.gmra.mxu0 %v608
      %v856 = vpop.f32.mrf.mxu0
      %v857 = vadd.f32 %v635, %v856
      %v858 = vpop.f32.mrf.mxu0
      %v859 = vadd.f32 %v639, %v858
      %v860 = vpop.f32.mrf.mxu0
      %v861 = vadd.f32 %v635, %v860
      %v862 = vpop.f32.mrf.mxu0
      %v863 = vadd.f32 %v639, %v862
      %864 = vmatprep.mubr.bf16.mxu0 0
      %865 = vmatmul.mubr.bf16.gmra.mxu0 %v609
      %v866 = vpop.f32.mrf.mxu0
      %v867 = vadd.f32 %v635, %v866
      %v868 = vpop.f32.mrf.mxu0
      %v869 = vadd.f32 %v639, %v868
      %v870 = vpop.f32.mrf.mxu0
      %v871 = vadd.f32 %v635, %v870
      %v872 = vpop.f32.mrf.mxu0
      %v873 = vadd.f32 %v639, %v872
      %874 = vmatprep.mubr.bf16.mxu0 0
      %875 = vmatmul.mubr.bf16.gmra.mxu0 %v610
      %v876 = vpop.f32.mrf.mxu0
      %v877 = vadd.f32 %v635, %v876
      %v878 = vpop.f32.mrf.mxu0
      %v879 = vadd.f32 %v639, %v878
      %v880 = vpop.f32.mrf.mxu0
      %v881 = vadd.f32 %v635, %v880
      %v882 = vpop.f32.mrf.mxu0
      %v883 = vadd.f32 %v639, %v882
      %884 = vmatprep.mubr.bf16.mxu0 0
      %885 = vmatmul.mubr.bf16.gmra.mxu0 %v611
      %v886 = vpop.f32.mrf.mxu0
      %v887 = vadd.f32 %v635, %v886
      %v888 = vpop.f32.mrf.mxu0
      %v889 = vadd.f32 %v639, %v888
      %v890 = vpop.f32.mrf.mxu0
      %v891 = vadd.f32 %v635, %v890
      %v892 = vpop.f32.mrf.mxu0
      %v893 = vadd.f32 %v639, %v892
      %894 = vmatprep.mubr.bf16.mxu0 0
      %895 = vmatmul.mubr.bf16.gmra.mxu0 %v612
      %v896 = vpop.f32.mrf.mxu0
      %v897 = vadd.f32 %v635, %v896
      %v898 = vpop.f32.mrf.mxu0
      %v899 = vadd.f32 %v639, %v898
      %v900 = vpop.f32.mrf.mxu0
      %v901 = vadd.f32 %v635, %v900
      %v902 = vpop.f32.mrf.mxu0
      %v903 = vadd.f32 %v639, %v902
      %904 = vmatprep.mubr.bf16.mxu0 0
      %905 = vmatmul.mubr.bf16.gmra.mxu0 %v613
      %v906 = vpop.f32.mrf.mxu0
      %v907 = vadd.f32 %v635, %v906
      %v908 = vpop.f32.mrf.mxu0
      %v909 = vadd.f32 %v639, %v908
      %v910 = vpop.f32.mrf.mxu0
      %v911 = vadd.f32 %v635, %v910
      %v912 = vpop.f32.mrf.mxu0
      %v913 = vadd.f32 %v639, %v912
      %914 = vdwg.mxu0
      %v915 = vmax.f32 %v757, 0.0
      %v916 = vmax.f32 %v759, 0.0
      %v917 = vmax.f32 %v761, 0.0
      %v918 = vmax.f32 %v763, 0.0
      %v919 = vmax.f32 %v767, 0.0
      %v920 = vmax.f32 %v769, 0.0
      %v921 = vmax.f32 %v771, 0.0
      %v922 = vmax.f32 %v773, 0.0
      %v923 = vmax.f32 %v777, 0.0
      %v924 = vmax.f32 %v779, 0.0
      %v925 = vmax.f32 %v781, 0.0
      %v926 = vmax.f32 %v783, 0.0
      %v927 = vmax.f32 %v787, 0.0
      %v928 = vmax.f32 %v789, 0.0
      %v929 = vmax.f32 %v791, 0.0
      %v930 = vmax.f32 %v793, 0.0
      %v931 = vmax.f32 %v797, 0.0
      %v932 = vmax.f32 %v799, 0.0
      %v933 = vmax.f32 %v801, 0.0
      %v934 = vmax.f32 %v803, 0.0
      %v935 = vmax.f32 %v807, 0.0
      %v936 = vmax.f32 %v809, 0.0
      %v937 = vmax.f32 %v811, 0.0
      %v938 = vmax.f32 %v813, 0.0
      %v939 = vmax.f32 %v817, 0.0
      %v940 = vmax.f32 %v819, 0.0
      %v941 = vmax.f32 %v821, 0.0
      %v942 = vmax.f32 %v823, 0.0
      %v943 = vmax.f32 %v827, 0.0
      %v944 = vmax.f32 %v829, 0.0
      %v945 = vmax.f32 %v831, 0.0
      %v946 = vmax.f32 %v833, 0.0
      %v947 = vmax.f32 %v837, 0.0
      %v948 = vmax.f32 %v839, 0.0
      %v949 = vmax.f32 %v841, 0.0
      %v950 = vmax.f32 %v843, 0.0
      %v951 = vmax.f32 %v847, 0.0
      %v952 = vmax.f32 %v849, 0.0
      %v953 = vmax.f32 %v851, 0.0
      %v954 = vmax.f32 %v853, 0.0
      %v955 = vmax.f32 %v857, 0.0
      %v956 = vmax.f32 %v859, 0.0
      %v957 = vmax.f32 %v861, 0.0
      %v958 = vmax.f32 %v863, 0.0
      %v959 = vmax.f32 %v867, 0.0
      %v960 = vmax.f32 %v869, 0.0
      %v961 = vmax.f32 %v871, 0.0
      %v962 = vmax.f32 %v873, 0.0
      %v963 = vmax.f32 %v877, 0.0
      %v964 = vmax.f32 %v879, 0.0
      %v965 = vmax.f32 %v881, 0.0
      %v966 = vmax.f32 %v883, 0.0
      %v967 = vmax.f32 %v887, 0.0
      %v968 = vmax.f32 %v889, 0.0
      %v969 = vmax.f32 %v891, 0.0
      %v970 = vmax.f32 %v893, 0.0
      %v971 = vmax.f32 %v897, 0.0
      %v972 = vmax.f32 %v899, 0.0
      %v973 = vmax.f32 %v901, 0.0
      %v974 = vmax.f32 %v903, 0.0
      %v975 = vmax.f32 %v907, 0.0
      %v976 = vmax.f32 %v909, 0.0
      %v977 = vmax.f32 %v911, 0.0
      %v978 = vmax.f32 %v913, 0.0
      %v979 = vld [vmem:[%s5] sm:$0x3]
      %v981 = vlaneseq
      %v982 = vshrl.u32 %v981, 7
      %v983 = vsub.s32 0, %v982
      %v984 = vrot.slane %v979, %v983
      %v985 = vlaneseq
      %v986 = vshrl.u32 %v985, 7
      %v987 = vsub.s32 1, %v986
      %v988 = vrot.slane %v979, %v987
      %v991 = vmul.f32 %v915, %v984
      %v992 = vmul.f32 %v916, %v988
      %v993 = vmul.f32 %v917, %v984
      %v994 = vmul.f32 %v918, %v988
      %v995 = vmul.f32 %v919, %v984
      %v996 = vmul.f32 %v920, %v988
      %v997 = vmul.f32 %v921, %v984
      %v998 = vmul.f32 %v922, %v988
      %v999 = vmul.f32 %v923, %v984
      %v1000 = vmul.f32 %v924, %v988
      %v1001 = vmul.f32 %v925, %v984
      %v1002 = vmul.f32 %v926, %v988
      %v1003 = vmul.f32 %v927, %v984
      %v1004 = vmul.f32 %v928, %v988
      %v1005 = vmul.f32 %v929, %v984
      %v1006 = vmul.f32 %v930, %v988
      %v1007 = vmul.f32 %v931, %v984
      %v1008 = vmul.f32 %v932, %v988
      %v1009 = vmul.f32 %v933, %v984
      %v1010 = vmul.f32 %v934, %v988
      %v1011 = vmul.f32 %v935, %v984
      %v1012 = vmul.f32 %v936, %v988
      %v1013 = vmul.f32 %v937, %v984
      %v1014 = vmul.f32 %v938, %v988
      %v1015 = vmul.f32 %v939, %v984
      %v1016 = vmul.f32 %v940, %v988
      %v1017 = vmul.f32 %v941, %v984
      %v1018 = vmul.f32 %v942, %v988
      %v1019 = vmul.f32 %v943, %v984
      %v1020 = vmul.f32 %v944, %v988
      %v1021 = vmul.f32 %v945, %v984
      %v1022 = vmul.f32 %v946, %v988
      %v1023 = vmul.f32 %v947, %v984
      %v1024 = vmul.f32 %v948, %v988
      %v1025 = vmul.f32 %v949, %v984
      %v1026 = vmul.f32 %v950, %v988
      %v1027 = vmul.f32 %v951, %v984
      %v1028 = vmul.f32 %v952, %v988
      %v1029 = vmul.f32 %v953, %v984
      %v1030 = vmul.f32 %v954, %v988
      %v1031 = vmul.f32 %v955, %v984
      %v1032 = vmul.f32 %v956, %v988
      %v1033 = vmul.f32 %v957, %v984
      %v1034 = vmul.f32 %v958, %v988
      %v1035 = vmul.f32 %v959, %v984
      %v1036 = vmul.f32 %v960, %v988
      %v1037 = vmul.f32 %v961, %v984
      %v1038 = vmul.f32 %v962, %v988
      %v1039 = vmul.f32 %v963, %v984
      %v1040 = vmul.f32 %v964, %v988
      %v1041 = vmul.f32 %v965, %v984
      %v1042 = vmul.f32 %v966, %v988
      %v1043 = vmul.f32 %v967, %v984
      %v1044 = vmul.f32 %v968, %v988
      %v1045 = vmul.f32 %v969, %v984
      %v1046 = vmul.f32 %v970, %v988
      %v1047 = vmul.f32 %v971, %v984
      %v1048 = vmul.f32 %v972, %v988
      %v1049 = vmul.f32 %v973, %v984
      %v1050 = vmul.f32 %v974, %v988
      %v1051 = vmul.f32 %v975, %v984
      %v1052 = vmul.f32 %v976, %v988
      %v1053 = vmul.f32 %v977, %v984
      %v1054 = vmul.f32 %v978, %v988
      %v1055 = vadd.f32 %v991, %v992
      %1056 = vadd.xlane.f32.xlu0 %v1055
      %v1057 = vpop.xlane.xlu0 %1056
      %v1058 = vadd.f32 %v993, %v994
      %1059 = vadd.xlane.f32.xlu0 %v1058
      %v1060 = vpop.xlane.xlu0 %1059
      %v1061 = vadd.f32 %v995, %v996
      %1062 = vadd.xlane.f32.xlu0 %v1061
      %v1063 = vpop.xlane.xlu0 %1062
      %v1064 = vadd.f32 %v997, %v998
      %1065 = vadd.xlane.f32.xlu0 %v1064
      %v1066 = vpop.xlane.xlu0 %1065
      %v1067 = vadd.f32 %v999, %v1000
      %1068 = vadd.xlane.f32.xlu0 %v1067
      %v1069 = vpop.xlane.xlu0 %1068
      %v1070 = vadd.f32 %v1001, %v1002
      %1071 = vadd.xlane.f32.xlu0 %v1070
      %v1072 = vpop.xlane.xlu0 %1071
      %v1073 = vadd.f32 %v1003, %v1004
      %1074 = vadd.xlane.f32.xlu0 %v1073
      %v1075 = vpop.xlane.xlu0 %1074
      %v1076 = vadd.f32 %v1005, %v1006
      %1077 = vadd.xlane.f32.xlu0 %v1076
      %v1078 = vpop.xlane.xlu0 %1077
      %v1079 = vadd.f32 %v1007, %v1008
      %1080 = vadd.xlane.f32.xlu0 %v1079
      %v1081 = vpop.xlane.xlu0 %1080
      %v1082 = vadd.f32 %v1009, %v1010
      %1083 = vadd.xlane.f32.xlu0 %v1082
      %v1084 = vpop.xlane.xlu0 %1083
      %v1085 = vadd.f32 %v1011, %v1012
      %1086 = vadd.xlane.f32.xlu0 %v1085
      %v1087 = vpop.xlane.xlu0 %1086
      %v1088 = vadd.f32 %v1013, %v1014
      %1089 = vadd.xlane.f32.xlu0 %v1088
      %v1090 = vpop.xlane.xlu0 %1089
      %v1091 = vadd.f32 %v1015, %v1016
      %1092 = vadd.xlane.f32.xlu0 %v1091
      %v1093 = vpop.xlane.xlu0 %1092
      %v1094 = vadd.f32 %v1017, %v1018
      %1095 = vadd.xlane.f32.xlu0 %v1094
      %v1096 = vpop.xlane.xlu0 %1095
      %v1097 = vadd.f32 %v1019, %v1020
      %1098 = vadd.xlane.f32.xlu0 %v1097
      %v1099 = vpop.xlane.xlu0 %1098
      %v1100 = vadd.f32 %v1021, %v1022
      %1101 = vadd.xlane.f32.xlu0 %v1100
      %v1102 = vpop.xlane.xlu0 %1101
      %v1103 = vadd.f32 %v1023, %v1024
      %1104 = vadd.xlane.f32.xlu0 %v1103
      %v1105 = vpop.xlane.xlu0 %1104
      %v1106 = vadd.f32 %v1025, %v1026
      %1107 = vadd.xlane.f32.xlu0 %v1106
      %v1108 = vpop.xlane.xlu0 %1107
      %v1109 = vadd.f32 %v1027, %v1028
      %1110 = vadd.xlane.f32.xlu0 %v1109
      %v1111 = vpop.xlane.xlu0 %1110
      %v1112 = vadd.f32 %v1029, %v1030
      %1113 = vadd.xlane.f32.xlu0 %v1112
      %v1114 = vpop.xlane.xlu0 %1113
      %v1115 = vadd.f32 %v1031, %v1032
      %1116 = vadd.xlane.f32.xlu0 %v1115
      %v1117 = vpop.xlane.xlu0 %1116
      %v1118 = vadd.f32 %v1033, %v1034
      %1119 = vadd.xlane.f32.xlu0 %v1118
      %v1120 = vpop.xlane.xlu0 %1119
      %v1121 = vadd.f32 %v1035, %v1036
      %1122 = vadd.xlane.f32.xlu0 %v1121
      %v1123 = vpop.xlane.xlu0 %1122
      %v1124 = vadd.f32 %v1037, %v1038
      %1125 = vadd.xlane.f32.xlu0 %v1124
      %v1126 = vpop.xlane.xlu0 %1125
      %v1127 = vadd.f32 %v1039, %v1040
      %1128 = vadd.xlane.f32.xlu0 %v1127
      %v1129 = vpop.xlane.xlu0 %1128
      %v1130 = vadd.f32 %v1041, %v1042
      %1131 = vadd.xlane.f32.xlu0 %v1130
      %v1132 = vpop.xlane.xlu0 %1131
      %v1133 = vadd.f32 %v1043, %v1044
      %1134 = vadd.xlane.f32.xlu0 %v1133
      %v1135 = vpop.xlane.xlu0 %1134
      %v1136 = vadd.f32 %v1045, %v1046
      %1137 = vadd.xlane.f32.xlu0 %v1136
      %v1138 = vpop.xlane.xlu0 %1137
      %v1139 = vadd.f32 %v1047, %v1048
      %1140 = vadd.xlane.f32.xlu0 %v1139
      %v1141 = vpop.xlane.xlu0 %1140
      %v1142 = vadd.f32 %v1049, %v1050
      %1143 = vadd.xlane.f32.xlu0 %v1142
      %v1144 = vpop.xlane.xlu0 %1143
      %v1145 = vadd.f32 %v1051, %v1052
      %1146 = vadd.xlane.f32.xlu0 %v1145
      %v1147 = vpop.xlane.xlu0 %1146
      %v1148 = vadd.f32 %v1053, %v1054
      %1149 = vadd.xlane.f32.xlu0 %v1148
      %v1150 = vpop.xlane.xlu0 %1149
      %v1151 = vld [vmem:[#allocation2] sm:$0x1]
      %v1153 = vlaneseq
      %v1154 = vshrl.u32 %v1153, 7
      %v1155 = vsub.s32 0, %v1154
      %v1156 = vrot.slane %v1151, %v1155
      %v1158 = vadd.f32 %v1057, %v1156
      %v1159 = vadd.f32 %v1060, %v1156
      %v1160 = vadd.f32 %v1063, %v1156
      %v1161 = vadd.f32 %v1066, %v1156
      %v1162 = vadd.f32 %v1069, %v1156
      %v1163 = vadd.f32 %v1072, %v1156
      %v1164 = vadd.f32 %v1075, %v1156
      %v1165 = vadd.f32 %v1078, %v1156
      %v1166 = vadd.f32 %v1081, %v1156
      %v1167 = vadd.f32 %v1084, %v1156
      %v1168 = vadd.f32 %v1087, %v1156
      %v1169 = vadd.f32 %v1090, %v1156
      %v1170 = vadd.f32 %v1093, %v1156
      %v1171 = vadd.f32 %v1096, %v1156
      %v1172 = vadd.f32 %v1099, %v1156
      %v1173 = vadd.f32 %v1102, %v1156
      %v1174 = vadd.f32 %v1105, %v1156
      %v1175 = vadd.f32 %v1108, %v1156
      %v1176 = vadd.f32 %v1111, %v1156
      %v1177 = vadd.f32 %v1114, %v1156
      %v1178 = vadd.f32 %v1117, %v1156
      %v1179 = vadd.f32 %v1120, %v1156
      %v1180 = vadd.f32 %v1123, %v1156
      %v1181 = vadd.f32 %v1126, %v1156
      %v1182 = vadd.f32 %v1129, %v1156
      %v1183 = vadd.f32 %v1132, %v1156
      %v1184 = vadd.f32 %v1135, %v1156
      %v1185 = vadd.f32 %v1138, %v1156
      %v1186 = vadd.f32 %v1141, %v1156
      %v1187 = vadd.f32 %v1144, %v1156
      %v1188 = vadd.f32 %v1147, %v1156
      %v1189 = vadd.f32 %v1150, %v1156
      %vm1190 = vcmask 7168
      %1191 = vst.msk [vmem:[%s282] sm:$0xff] %vm1190, %v1158
      %1192 = vst.msk [vmem:[%s282 + $0x8] sm:$0xff] %vm1190, %v1159
      %1193 = vst.msk [vmem:[%s282 + $0x10] sm:$0xff] %vm1190, %v1160
      %1194 = vst.msk [vmem:[%s282 + $0x18] sm:$0xff] %vm1190, %v1161
      %1195 = vst.msk [vmem:[%s282 + $0x20] sm:$0xff] %vm1190, %v1162
      %1196 = vst.msk [vmem:[%s282 + $0x28] sm:$0xff] %vm1190, %v1163
      %1197 = vst.msk [vmem:[%s282 + $0x30] sm:$0xff] %vm1190, %v1164
      %1198 = vst.msk [vmem:[%s282 + $0x38] sm:$0xff] %vm1190, %v1165
      %1199 = vst.msk [vmem:[%s282 + $0x40] sm:$0xff] %vm1190, %v1166
      %1200 = vst.msk [vmem:[%s282 + $0x48] sm:$0xff] %vm1190, %v1167
      %1201 = vst.msk [vmem:[%s282 + $0x50] sm:$0xff] %vm1190, %v1168
      %1202 = vst.msk [vmem:[%s282 + $0x58] sm:$0xff] %vm1190, %v1169
      %1203 = vst.msk [vmem:[%s282 + $0x60] sm:$0xff] %vm1190, %v1170
      %1204 = vst.msk [vmem:[%s282 + $0x68] sm:$0xff] %vm1190, %v1171
      %1205 = vst.msk [vmem:[%s282 + $0x70] sm:$0xff] %vm1190, %v1172
      %1206 = vst.msk [vmem:[%s282 + $0x78] sm:$0xff] %vm1190, %v1173
      %1207 = vst.msk [vmem:[%s282 + $0x80] sm:$0xff] %vm1190, %v1174
      %1208 = vst.msk [vmem:[%s282 + $0x88] sm:$0xff] %vm1190, %v1175
      %1209 = vst.msk [vmem:[%s282 + $0x90] sm:$0xff] %vm1190, %v1176
      %1210 = vst.msk [vmem:[%s282 + $0x98] sm:$0xff] %vm1190, %v1177
      %1211 = vst.msk [vmem:[%s282 + $0xa0] sm:$0xff] %vm1190, %v1178
      %1212 = vst.msk [vmem:[%s282 + $0xa8] sm:$0xff] %vm1190, %v1179
      %1213 = vst.msk [vmem:[%s282 + $0xb0] sm:$0xff] %vm1190, %v1180
      %1214 = vst.msk [vmem:[%s282 + $0xb8] sm:$0xff] %vm1190, %v1181
      %1215 = vst.msk [vmem:[%s282 + $0xc0] sm:$0xff] %vm1190, %v1182
      %1216 = vst.msk [vmem:[%s282 + $0xc8] sm:$0xff] %vm1190, %v1183
      %1217 = vst.msk [vmem:[%s282 + $0xd0] sm:$0xff] %vm1190, %v1184
      %1218 = vst.msk [vmem:[%s282 + $0xd8] sm:$0xff] %vm1190, %v1185
      %1219 = vst.msk [vmem:[%s282 + $0xe0] sm:$0xff] %vm1190, %v1186
      %1220 = vst.msk [vmem:[%s282 + $0xe8] sm:$0xff] %vm1190, %v1187
      %1221 = vst.msk [vmem:[%s282 + $0xf0] sm:$0xff] %vm1190, %v1188
      %1222 = vst.msk [vmem:[%s282 + $0xf8] sm:$0xff] %vm1190, %v1189
      %s1223 = smul.u32 32, %s20
      %p1224 = scmp.lt.s32.totalorder %s1223, 63
      %s1225 = scalar_select %p1224, %s1223, 63
      %s1226 = smul.addr %s1225, 8
      %s1227 = scalar_lea.vmem %s7, %s1226
      // Predicated region
      $region49: #{tpu_custom_call.1} parent=47 // pred_check
        %p1228 = pneg %p190
      $region50: #{tpu_custom_call.1} parent=47 // pred_check_branch
        %1230 = sbr.rel (%p1228) target = $region52
      $region51: #{tpu_custom_call.1} parent=47 // pred_region
        %s1231 = smul.u32 32, %s20
      $region52: #{tpu_custom_call.1} parent=47 // pred_fallthru
        _
    $region48: #{tpu_custom_call.1} parent=5 // pred_fallthru
      _
    %p1232 = scmp.le.s32.totalorder 2, %s15
    // Predicated region
    $region53: #{tpu_custom_call.1} parent=5 // pred_check
      %p1233 = pneg %p1232
    $region54: #{tpu_custom_call.1} parent=5 // pred_check_branch
      %1235 = sbr.rel (%p1233) target = $region56
    $region55: #{tpu_custom_call.1} parent=5 // pred_region
      %s1236 = ssub.s32 %s15, 2
      // Predicated region
      $region57: #{tpu_custom_call.1} parent=55 // pred_check
        %p1237 = pneg %p196
      $region58: #{tpu_custom_call.1} parent=55 // pred_check_branch
        %1239 = sbr.rel (%p1237) target = $region60
      $region59: #{tpu_custom_call.1} parent=55 // pred_region
        %s1240 = smul.u32 32, %s21
        %p1241 = scmp.lt.s32.totalorder %s1240, 63
        %s1242 = scalar_select %p1241, %s1240, 63
        %s1243 = smul.addr %s1242, 8
        %s1244 = scalar_lea.vmem %s7, %s1243
      $region60: #{tpu_custom_call.1} parent=55 // pred_fallthru
        _
    $region56: #{tpu_custom_call.1} parent=5 // pred_fallthru
      _
  $region6: #{tpu_custom_call.1} parent=0 // loop_footer
    %s19 = sadd.s32 1, %s15
  $region7: #{tpu_custom_call.1} parent=0 // loop_footer_branch
    %14 = sbr.rel target = $region3
  $region8: #{tpu_custom_call.1} parent=0 // loop_exit
    _

</llo_original>
